<compile_context>
chip_gen: v7x
topology: tpu7x:2x2x1
jax: 0.10.0
libtpu: 0.0.40
codegen_flags: <defaults>
</compile_context>

<pallas_src>
import jax
import jax.numpy as jnp
from jax.experimental import pallas as pl
from jax.experimental.pallas import tpu as pltpu


def _round_up(n, m):
    return ((n + m - 1) // m) * m


def _cdiv(a, b):
    return (a + b - 1) // b


def mlp_kernel(x_ref, w1_ref, b1_ref, w2_ref, b2_ref, out_ref):
    # Layer 1 on the MXU, f32 with f32 accumulation.
    x = x_ref[...]                                                    # (TB, F) f32
    h = jnp.dot(x, w1_ref[...], preferred_element_type=jnp.float32)  # (TB, Hp) f32
    # Bias + ReLU on the VPU in f32 (v5e has no bf16 VPU path anyway).
    h = jnp.maximum(h + b1_ref[...], 0.0)                            # (TB, Hp)
    # Layer 2 (single output unit) computed transposed: (1, Hp) . (TB, Hp)^T
    # -> (1, TB), so batch lands on the lane axis (lane-dense store).
    o = jax.lax.dot_general(
        w2_ref[...], h,
        dimension_numbers=(((1,), (1,)), ((), ())),
        preferred_element_type=jnp.float32)                          # (1, TB)
    out_ref[...] = o + b2_ref[0, 0]                                  # scalar from SMEM


def prepare_params(w1, b1, w2, b2):
    """One-time (model-load-time) parameter prep. Do NOT call per forward.

    PyTorch layout in:  w1 (H, F), b1 (H,), w2 (O, H), b2 (O,)  with O == 1.
    Returns kernel layout: W1 (F, Hp) f32, b1 (1, Hp) f32,
                           W2 (1, Hp) f32, b2 (1, 1) f32,  Hp = pad(H, 128).
    Zero-padded hidden columns produce relu(0 + 0) = 0 and W2 there is 0, so
    the padding never changes the result.
    """
    w1 = jnp.asarray(w1, jnp.float32)
    b1 = jnp.asarray(b1, jnp.float32)
    w2 = jnp.asarray(w2, jnp.float32)
    b2 = jnp.asarray(b2, jnp.float32)
    H, F = w1.shape
    O = w2.shape[0]
    assert O == 1, "kernel is specialized for the single-output Boston Net"
    Hp = max(128, _round_up(H, 128))

    w1_t = jnp.zeros((F, Hp), jnp.float32).at[:, :H].set(w1.T)
    b1_p = jnp.zeros((1, Hp), jnp.float32).at[:, :H].set(b1[None, :])
    w2_p = jnp.zeros((1, Hp), jnp.float32).at[:, :H].set(w2)
    b2_p = b2.reshape(1, 1)
    return w1_t, b1_p, w2_p, b2_p


# Batch tiling policy.
_SINGLE_BLOCK_MAX = 1024   # below this: one resident tile (launch-overhead bound)
_TB_MAX = 8192             # per-step tile; ~8 MiB double-buffered x + 4 MiB h in VMEM


def net_forward(x, params):
    """Net forward: relu(x @ W1 + b1) @ W2 + b2, fused in one Pallas kernel.

    x: (B, F) float32.  params: output of prepare_params() (reused every call).
    Returns (B, 1) float32.
    """
    w1p, b1p, w2p, b2p = params
    B, F = x.shape
    Hp = w1p.shape[1]

    if B <= _SINGLE_BLOCK_MAX:
        # One resident block; block dims equal the full (padded) array dims.
        Bp = _round_up(B, 8)
        TB = Bp
        nsteps = 1
    else:
        # >= 2 grid steps so v7x's 2 TensorCores both get work; TB is a
        # multiple of 128 so the (1, TB) out block / (TB, F) x block satisfy
        # the (8,128) tiling rule, capped at _TB_MAX for VMEM.
        nsteps = max(2, _cdiv(B, _TB_MAX))
        TB = _round_up(_cdiv(B, nsteps), 128)
        Bp = TB * nsteps

    # Padded rows are zeros -> they produce relu(b1)@W2 + b2 garbage in the
    # padded output region, which is sliced off below (never returned).
    x_p = x if Bp == B else jnp.pad(x, ((0, Bp - B), (0, 0)))
    grid = (nsteps,)

    flops = 2 * Bp * F * Hp + 2 * Bp * Hp + 2 * Bp * Hp   # mm1 + bias/relu + mm2
    bytes_accessed = (x_p.size * 4 + w1p.size * 4 + b1p.size * 4
                      + w2p.size * 4 + 4 + Bp * 4)

    out_t = pl.pallas_call(
        mlp_kernel,
        out_shape=jax.ShapeDtypeStruct((1, Bp), jnp.float32),
        grid=grid,
        in_specs=[
            pl.BlockSpec((TB, F), lambda i: (i, 0)),    # x: tiled over batch
            pl.BlockSpec((F, Hp), lambda i: (0, 0)),    # W1: resident in VMEM
            pl.BlockSpec((1, Hp), lambda i: (0, 0)),    # b1: resident
            pl.BlockSpec((1, Hp), lambda i: (0, 0)),    # W2 row: resident
            pl.BlockSpec(memory_space=pltpu.MemorySpace.SMEM),  # b2 scalar in SMEM
        ],
        out_specs=pl.BlockSpec((1, TB), lambda i: (0, i)),      # lane-dense output
        compiler_params=pltpu.CompilerParams(
            dimension_semantics=("parallel",)),
        cost_estimate=pl.CostEstimate(
            flops=flops, transcendentals=0, bytes_accessed=bytes_accessed),
    )(x_p, w1p, b1p, w2p, b2p)

    # (1, Bp) and (Bp, 1) share the same row-major order -> free reshape.
    out = out_t.reshape(Bp, 1)
    return out if Bp == B else out[:B]


def _reference(x, w1, b1, w2, b2):
    h = jnp.maximum(x @ w1.T + b1, 0.0)
    return h @ w2.T + b2


if __name__ == "__main__":
    # Boston housing: 13 features, hidden 100, 1 output.
    B, FEATURE, HIDDEN, OUTPUT = 8, 13, 100, 1

    key = jax.random.PRNGKey(0)
    kx, kw1, kb1, kw2, kb2, kx2 = jax.random.split(key, 6)

    x = jax.random.normal(kx, (B, FEATURE), dtype=jnp.float32)

    # PyTorch-style init: U(-1/sqrt(fan_in), 1/sqrt(fan_in)).
    bound1 = 1.0 / (FEATURE ** 0.5)
    w1 = jax.random.uniform(kw1, (HIDDEN, FEATURE), jnp.float32, -bound1, bound1)
    b1 = jax.random.uniform(kb1, (HIDDEN,), jnp.float32, -bound1, bound1)
    bound2 = 1.0 / (HIDDEN ** 0.5)
    w2 = jax.random.uniform(kw2, (OUTPUT, HIDDEN), jnp.float32, -bound2, bound2)
    b2 = jax.random.uniform(kb2, (OUTPUT,), jnp.float32, -bound2, bound2)

    # One-time weight prep (load time), then a jitted per-call forward.
    params = jax.block_until_ready(prepare_params(w1, b1, w2, b2))
    fwd = jax.jit(net_forward)

    # Small-batch path (grid = 1).
    out = jax.block_until_ready(fwd(x, params))
    ref = _reference(x, w1, b1, w2, b2)
    assert out.shape == (B, OUTPUT), out.shape
    assert jnp.allclose(out, ref, atol=1e-2, rtol=1e-2), "mismatch vs reference (small B)"

    # Multi-tile path (grid >= 2, exercises batch tiling + padding + slicing).
    B2 = 2000
    x2 = jax.random.normal(kx2, (B2, FEATURE), dtype=jnp.float32)
    out2 = jax.block_until_ready(fwd(x2, params))
    ref2 = _reference(x2, w1, b1, w2, b2)
    assert out2.shape == (B2, OUTPUT), out2.shape
    assert jnp.allclose(out2, ref2, atol=1e-2, rtol=1e-2), "mismatch vs reference (tiled B)"

    print("KERNEL_OK")
</pallas_src>

<mosaic_0001>
module attributes {stable_mosaic.version = 11 : i64} {
  func.func @mlp_kernel(%arg0: i32, %arg1: memref<8x13xf32, #tpu.memory_space<vmem>>, %arg2: memref<13x128xf32, #tpu.memory_space<vmem>>, %arg3: memref<1x128xf32, #tpu.memory_space<vmem>>, %arg4: memref<1x128xf32, #tpu.memory_space<vmem>>, %arg5: memref<1x1xf32, #tpu.memory_space<smem>>, %arg6: memref<1x8xf32, #tpu.memory_space<vmem>>) attributes {dimension_semantics = [#tpu.dimension_semantics<parallel>], iteration_bounds = array<i64: 1>, scalar_prefetch = 0 : i64, scratch_operands = 0 : i64, tpu.core_type = #tpu.core_type<tc>, window_params = [{transform_indices = @transform_0, window_bounds = array<i64: 8, 13>}, {pipeline_mode = #tpu.pipeline_mode<synchronous>, transform_indices = @transform_1, window_bounds = array<i64: 13, 128>}, {pipeline_mode = #tpu.pipeline_mode<synchronous>, transform_indices = @transform_2, window_bounds = array<i64: 1, 128>}, {pipeline_mode = #tpu.pipeline_mode<synchronous>, transform_indices = @transform_3, window_bounds = array<i64: 1, 128>}, {transform_indices = @transform_4, window_bounds = array<i64: 1, 1>}, {transform_indices = @transform_5, window_bounds = array<i64: 1, 8>}]} {
    %c0 = arith.constant 0 : index
    %c0_0 = arith.constant 0 : index
    %0 = vector.load %arg1[%c0, %c0_0] : memref<8x13xf32, #tpu.memory_space<vmem>>, vector<8x13xf32>
    %c0_1 = arith.constant 0 : index
    %c0_2 = arith.constant 0 : index
    %1 = vector.load %arg2[%c0_1, %c0_2] : memref<13x128xf32, #tpu.memory_space<vmem>>, vector<13x128xf32>
    %cst = arith.constant dense<0.000000e+00> : vector<8x128xf32>
    %2 = tpu.matmul %0, %1, %cst {dimension_numbers = #tpu.dot_dimension_numbers<[1], [0], [0], [1], [0, 0, 1, 1], [], []>} : vector<8x13xf32>, vector<13x128xf32>, vector<8x128xf32> -> vector<8x128xf32>
    %c0_3 = arith.constant 0 : index
    %c0_4 = arith.constant 0 : index
    %3 = vector.load %arg3[%c0_3, %c0_4] : memref<1x128xf32, #tpu.memory_space<vmem>>, vector<1x128xf32>
    %4 = vector.broadcast %3 : vector<1x128xf32> to vector<8x128xf32>
    %5 = arith.addf %2, %4 : vector<8x128xf32>
    %cst_5 = arith.constant 0.000000e+00 : f32
    %6 = vector.broadcast %cst_5 : f32 to vector<8x128xf32>
    %7 = arith.maximumf %5, %6 : vector<8x128xf32>
    %c0_6 = arith.constant 0 : index
    %c0_7 = arith.constant 0 : index
    %8 = vector.load %arg4[%c0_6, %c0_7] : memref<1x128xf32, #tpu.memory_space<vmem>>, vector<1x128xf32>
    %cst_8 = arith.constant dense<0.000000e+00> : vector<1x8xf32>
    %9 = tpu.matmul %8, %7, %cst_8 {dimension_numbers = #tpu.dot_dimension_numbers<[1], [1], [0], [0], [0, 0, 1, 0], [], []>} : vector<1x128xf32>, vector<8x128xf32>, vector<1x8xf32> -> vector<1x8xf32>
    %c0_9 = arith.constant 0 : index
    %c0_10 = arith.constant 0 : index
    %10 = memref.load %arg5[%c0_9, %c0_10] : memref<1x1xf32, #tpu.memory_space<smem>>
    %11 = vector.broadcast %10 : f32 to vector<1x8xf32>
    %12 = arith.addf %9, %11 : vector<1x8xf32>
    %c0_11 = arith.constant 0 : index
    %c0_12 = arith.constant 0 : index
    %13 = vector.load %arg6[%c0_11, %c0_12] : memref<1x8xf32, #tpu.memory_space<vmem>>, vector<1x8xf32>
    tpu.vector_store %arg6[%c0_11, %c0_12], %12 {strides = array<i32>} : memref<1x8xf32, #tpu.memory_space<vmem>>, vector<1x8xf32>,
    return
  }
  func.func @transform_0(%arg0: i32) -> (i32, i32) {
    %c0_i32 = arith.constant 0 : i32
    %c0_i32_0 = arith.constant 0 : i32
    return %arg0, %c0_i32 : i32, i32
  }
  func.func @transform_1(%arg0: i32) -> (i32, i32) {
    %c0_i32 = arith.constant 0 : i32
    %c0_i32_0 = arith.constant 0 : i32
    %c0_i32_1 = arith.constant 0 : i32
    return %c0_i32, %c0_i32_0 : i32, i32
  }
  func.func @transform_2(%arg0: i32) -> (i32, i32) {
    %c0_i32 = arith.constant 0 : i32
    %c0_i32_0 = arith.constant 0 : i32
    %c0_i32_1 = arith.constant 0 : i32
    return %c0_i32, %c0_i32_0 : i32, i32
  }
  func.func @transform_3(%arg0: i32) -> (i32, i32) {
    %c0_i32 = arith.constant 0 : i32
    %c0_i32_0 = arith.constant 0 : i32
    %c0_i32_1 = arith.constant 0 : i32
    return %c0_i32, %c0_i32_0 : i32, i32
  }
  func.func @transform_4(%arg0: i32) -> (i32, i32) {
    %c0_i32 = arith.constant 0 : i32
    %c0_i32_0 = arith.constant 0 : i32
    %c0_i32_1 = arith.constant 0 : i32
    return %c0_i32, %c0_i32_0 : i32, i32
  }
  func.func @transform_5(%arg0: i32) -> (i32, i32) {
    %c0_i32 = arith.constant 0 : i32
    %c0_i32_0 = arith.constant 0 : i32
    return %c0_i32, %arg0 : i32, i32
  }
}

</mosaic_0001>

<llo_original>
// kernel: net_forward.1
$region0: #{net_forward.1}
  #allocation0 [shape = 'u32[]', space=smem, size = 0x4, offset = 0x4, fixed_abs, tag = 'smem constant byte address 0x4 - core index']
  #allocation1 [shape = 'u32[144,128]{1,0:T(1,128)}', space=vmem, size = 0x12000, scoped, tag = 'internal scratch']
  #allocation2 [shape = 'f32[1,1]{1,0:T(1,128)S(6)}', space=smem, size = 0x200, scoped, tag = 'scoped memory for net_forward.1']
  %s0 = inlined_call_operand.hbm [shape: f32[8,13], index: 0, kind: input, shape index: {}]
  %s1 = inlined_call_operand.hbm [shape: f32[13,128], index: 1, kind: input, shape index: {}]
  %s2 = inlined_call_operand.vmem [shape: f32[1,128], index: 2, kind: input, shape index: {}]
  %s3 = inlined_call_operand.vmem [shape: f32[1,128], index: 3, kind: input, shape index: {}]
  %s4 = inlined_call_operand.<no memory space> [shape: f32[1,1], index: 4, kind: input, shape index: {}]
  %s5 = inlined_call_operand.hbm [shape: f32[1,8], index: 5, kind: output, shape index: {}]
  %s6 = sld [smem:[#allocation0]]
  $region38: #{net_forward.1} parent=0
    _
  %s8 = ssub.s32 1, %s6
  %s9 = scalar_select 0, %s8, %s6
  %10 = sst [smem:[#allocation2]] %s4
  $region1: #{net_forward.1} parent=0
    #allocation3 [shape = 'u8[4096]{0}', space=vmem, size = 0x1000, scoped, tag = 'input window, operand 0, single buffered']
    #allocation4 [shape = 's32[1]{0}', space=sflag, size = 0x4, scoped, tag = 'scoped memory for net_forward.1']
    #allocation5 [shape = 's32[1]{0}', space=sflag, size = 0x4, scoped, tag = 'scoped memory for net_forward.1']
    #allocation6 [shape = 'u8[8192]{0}', space=vmem, size = 0x2000, scoped, tag = 'input window, operand 1, single buffered']
    #allocation7 [shape = 's32[1]{0}', space=sflag, size = 0x4, scoped, tag = 'scoped memory for net_forward.1']
    #allocation8 [shape = 'u8[512]{0}', space=vmem, size = 0x400, scoped, tag = 'output window, operand 0, single buffered']
    %11 = vsyncpa [#allocation4], 0
    %12 = vsyncpa [#allocation7], 0
    %13 = vsyncpa [#allocation5], 0
    // Predicated region
    $region2: #{net_forward.1} parent=1 // pred_check
      _
    $region3: #{net_forward.1} parent=1 // pred_check_branch
      %15 = sbr.rel (0) target = $region5
    $region4: #{net_forward.1} parent=1 // pred_region
      %s17 = ssub.s32 128, 128
      %18 = vsyncadd [#allocation4], %s17
      %s20 = sshll.u32 [#allocation3], 4
      %s21 = int_to_ptr.vmem [resolvable:$true] %s20
      %23 = dma.hbm_to_vmem [thread:$0]  %s0, 128, %s21, [#allocation4]
    $region5: #{net_forward.1} parent=1 // pred_fallthru
      _
    // Predicated region
    $region6: #{net_forward.1} parent=1 // pred_check
      _
    $region7: #{net_forward.1} parent=1 // pred_check_branch
      %25 = sbr.rel (0) target = $region9
    $region8: #{net_forward.1} parent=1 // pred_region
      %s27 = ssub.s32 256, 256
      %28 = vsyncadd [#allocation7], %s27
      %s29 = sshll.u32 [#allocation6], 4
      %s30 = int_to_ptr.vmem [resolvable:$true] %s29
      %35 = dma.hbm_to_vmem [thread:$0]  %s1, 256, %s30, [#allocation7], 128, 128, 8
    $region9: #{net_forward.1} parent=1 // pred_fallthru
      _
    // Predicated region
    $region10: #{net_forward.1} parent=1 // pred_check
      _
    $region11: #{net_forward.1} parent=1 // pred_check_branch
      %37 = sbr.rel (0) target = $region13
    $region12: #{net_forward.1} parent=1 // pred_region
      _
    $region13: #{net_forward.1} parent=1 // pred_fallthru
      _
    // Predicated region
    $region14: #{net_forward.1} parent=1 // pred_check
      _
    $region15: #{net_forward.1} parent=1 // pred_check_branch
      %39 = sbr.rel (0) target = $region17
    $region16: #{net_forward.1} parent=1 // pred_region
      _
    $region17: #{net_forward.1} parent=1 // pred_fallthru
      _
    // Predicated region
    $region18: #{net_forward.1} parent=1 // pred_check
      _
    $region19: #{net_forward.1} parent=1 // pred_check_branch
      %41 = sbr.rel (0) target = $region21
    $region20: #{net_forward.1} parent=1 // pred_region
      _
    $region21: #{net_forward.1} parent=1 // pred_fallthru
      _
    // Predicated region
    $region22: #{net_forward.1} parent=1 // pred_check
      _
    $region23: #{net_forward.1} parent=1 // pred_check_branch
      %43 = sbr.rel (0) target = $region25
    $region24: #{net_forward.1} parent=1 // pred_region
      %44 = dma.done [#allocation4], 128
    $region25: #{net_forward.1} parent=1 // pred_fallthru
      _
    // Predicated region
    $region26: #{net_forward.1} parent=1 // pred_check
      _
    $region27: #{net_forward.1} parent=1 // pred_check_branch
      %46 = sbr.rel (0) target = $region29
    $region28: #{net_forward.1} parent=1 // pred_region
      %47 = dma.done [#allocation7], 256
    $region29: #{net_forward.1} parent=1 // pred_fallthru
      _
    %v48 = vld [vmem:[#allocation3] sm:$0xff]
    %v49 = vld [vmem:[#allocation6] sm:$0xff]
    %v50 = vld [vmem:[#allocation6 + $0x8] sm:$0x1f]
    %v51 = vld [vmem:[%s2] sm:$0x1]
    %v53 = vlaneseq
    %v54 = vshrl.u32 %v53, 7
    %v55 = vsub.s32 0, %v54
    %v56 = vrot.slane %v51, %v55
    %vm58 = vcmask 105472
    %v60 = vsel %vm58, %v48, 0
    %vm62 = vcmask 1044480
    %v64 = vsel %vm62, %v50, 0
    %66 = vmatprep.subr.mxu0 0.0
    %67 = vmatpush1.msra.mxu0 %v49
    %68 = vmatprep.subr.mxu0 0.0
    %69 = vmatpush1.msra.mxu0 %v64
    %70 = vmatprep.subr.mxu0 0.0
    %71 = vmatpush1.msra.mxu0 0.0
    %72 = vmatprep.subr.mxu0 0.0
    %73 = vmatpush1.msra.mxu0 0.0
    %74 = vmatprep.subr.mxu0 0.0
    %75 = vmatpush1.msra.mxu0 0.0
    %76 = vmatprep.subr.mxu0 0.0
    %77 = vmatpush1.msra.mxu0 0.0
    %78 = vmatprep.subr.mxu0 0.0
    %79 = vmatpush1.msra.mxu0 0.0
    %80 = vmatprep.subr.mxu0 0.0
    %81 = vmatpush1.msra.mxu0 0.0
    %82 = vmatprep.subr.mxu0 0.0
    %83 = vmatpush1.msra.mxu0 0.0
    %84 = vmatprep.subr.mxu0 0.0
    %85 = vmatpush1.msra.mxu0 0.0
    %86 = vmatprep.subr.mxu0 0.0
    %87 = vmatpush1.msra.mxu0 0.0
    %88 = vmatprep.subr.mxu0 0.0
    %89 = vmatpush1.msra.mxu0 0.0
    %90 = vmatprep.subr.mxu0 0.0
    %91 = vmatpush1.msra.mxu0 0.0
    %92 = vmatprep.subr.mxu0 0.0
    %93 = vmatpush1.msra.mxu0 0.0
    %94 = vmatprep.subr.mxu0 0.0
    %95 = vmatpush1.msra.mxu0 0.0
    %96 = vmatprep.subr.mxu0 0.0
    %97 = vmatpush1.msra.mxu0 0.0
    %98 = vmatprep.subr.mxu0 0.0
    %99 = vmatpush1.msra.mxu0 0.0
    %100 = vmatprep.subr.mxu0 0.0
    %101 = vmatpush1.msra.mxu0 0.0
    %102 = vmatprep.subr.mxu0 0.0
    %103 = vmatpush1.msra.mxu0 0.0
    %104 = vmatprep.subr.mxu0 0.0
    %105 = vmatpush1.msra.mxu0 0.0
    %106 = vmatprep.subr.mxu0 0.0
    %107 = vmatpush1.msra.mxu0 0.0
    %108 = vmatprep.subr.mxu0 0.0
    %109 = vmatpush1.msra.mxu0 0.0
    %110 = vmatprep.subr.mxu0 0.0
    %111 = vmatpush1.msra.mxu0 0.0
    %112 = vmatprep.subr.mxu0 0.0
    %113 = vmatpush1.msra.mxu0 0.0
    %114 = vmatprep.subr.mxu0 0.0
    %115 = vmatpush1.msra.mxu0 0.0
    %116 = vmatprep.subr.mxu0 0.0
    %117 = vmatpush1.msra.mxu0 0.0
    %118 = vmatprep.subr.mxu0 0.0
    %119 = vmatpush1.msra.mxu0 0.0
    %120 = vmatprep.subr.mxu0 0.0
    %121 = vmatpush1.msra.mxu0 0.0
    %122 = vmatprep.subr.mxu0 0.0
    %123 = vmatpush1.msra.mxu0 0.0
    %124 = vmatprep.subr.mxu0 0.0
    %125 = vmatpush1.msra.mxu0 0.0
    %126 = vmatprep.subr.mxu0 0.0
    %127 = vmatpush1.msra.mxu0 0.0
    %128 = vmatprep.subr.mxu0 0.0
    %129 = vmatpush1.msra.mxu0 0.0
    %130 = vmatprep.mubr.f32.mxu0 0.0
    %131 = vmatmul.mubr.f32.gmra.mrb[0].mxu0 %v60
    %v132 = vpop.f32.mrb[0].mxu0
    %v133 = vadd.f32 %v56, %v132
    %v134 = vpop.f32.mrb[0].mxu0
    %135 = vdwg.mxu0
    %v136 = vmax.f32 %v133, 0.0
    %v137 = vld [vmem:[%s3] sm:$0x1]
    %s138 = sld [smem:[#allocation2]]
    %v139 = vstv %s138
    %140 = vmatprep.subr.mxu0 0.0
    %141 = vmatpush1.xpose.msra.mxu0 %v136
    %142 = vmatprep.subr.mxu0 0.0
    %143 = vmatpush1.xpose.msra.mxu0 0.0
    %144 = vmatprep.subr.mxu0 0.0
    %145 = vmatpush1.xpose.msra.mxu0 0.0
    %146 = vmatprep.subr.mxu0 0.0
    %147 = vmatpush1.xpose.msra.mxu0 0.0
    %148 = vmatprep.subr.mxu0 0.0
    %149 = vmatpush1.xpose.msra.mxu0 0.0
    %150 = vmatprep.subr.mxu0 0.0
    %151 = vmatpush1.xpose.msra.mxu0 0.0
    %152 = vmatprep.subr.mxu0 0.0
    %153 = vmatpush1.xpose.msra.mxu0 0.0
    %154 = vmatprep.subr.mxu0 0.0
    %155 = vmatpush1.xpose.msra.mxu0 0.0
    %156 = vmatprep.subr.mxu0 0.0
    %157 = vmatpush1.xpose.msra.mxu0 0.0
    %158 = vmatprep.subr.mxu0 0.0
    %159 = vmatpush1.xpose.msra.mxu0 0.0
    %160 = vmatprep.subr.mxu0 0.0
    %161 = vmatpush1.xpose.msra.mxu0 0.0
    %162 = vmatprep.subr.mxu0 0.0
    %163 = vmatpush1.xpose.msra.mxu0 0.0
    %164 = vmatprep.subr.mxu0 0.0
    %165 = vmatpush1.xpose.msra.mxu0 0.0
    %166 = vmatprep.subr.mxu0 0.0
    %167 = vmatpush1.xpose.msra.mxu0 0.0
    %168 = vmatprep.subr.mxu0 0.0
    %169 = vmatpush1.xpose.msra.mxu0 0.0
    %170 = vmatprep.subr.mxu0 0.0
    %171 = vmatpush1.xpose.msra.mxu0 0.0
    %172 = vmatprep.subr.mxu0 0.0
    %173 = vmatpush1.xpose.msra.mxu0 0.0
    %174 = vmatprep.subr.mxu0 0.0
    %175 = vmatpush1.xpose.msra.mxu0 0.0
    %176 = vmatprep.subr.mxu0 0.0
    %177 = vmatpush1.xpose.msra.mxu0 0.0
    %178 = vmatprep.subr.mxu0 0.0
    %179 = vmatpush1.xpose.msra.mxu0 0.0
    %180 = vmatprep.subr.mxu0 0.0
    %181 = vmatpush1.xpose.msra.mxu0 0.0
    %182 = vmatprep.subr.mxu0 0.0
    %183 = vmatpush1.xpose.msra.mxu0 0.0
    %184 = vmatprep.subr.mxu0 0.0
    %185 = vmatpush1.xpose.msra.mxu0 0.0
    %186 = vmatprep.subr.mxu0 0.0
    %187 = vmatpush1.xpose.msra.mxu0 0.0
    %188 = vmatprep.subr.mxu0 0.0
    %189 = vmatpush1.xpose.msra.mxu0 0.0
    %190 = vmatprep.subr.mxu0 0.0
    %191 = vmatpush1.xpose.msra.mxu0 0.0
    %192 = vmatprep.subr.mxu0 0.0
    %193 = vmatpush1.xpose.msra.mxu0 0.0
    %194 = vmatprep.subr.mxu0 0.0
    %195 = vmatpush1.xpose.msra.mxu0 0.0
    %196 = vmatprep.subr.mxu0 0.0
    %197 = vmatpush1.xpose.msra.mxu0 0.0
    %198 = vmatprep.subr.mxu0 0.0
    %199 = vmatpush1.xpose.msra.mxu0 0.0
    %200 = vmatprep.subr.mxu0 0.0
    %201 = vmatpush1.xpose.msra.mxu0 0.0
    %202 = vmatprep.subr.mxu0 0.0
    %203 = vmatpush1.xpose.msra.mxu0 0.0
    %204 = vmatprep.mubr.f32.mxu0 0.0
    %205 = vmatmul.mubr.f32.gmra.mrb[0].mxu0 %v137
    %v206 = vpop.f32.mrb[0].mxu0
    %v207 = vadd.f32 %v139, %v206
    %v208 = vpop.f32.mrb[0].mxu0
    %209 = vdwg.mxu0
    %vm210 = vcmask 57344
    %211 = vst.msk [vmem:[#allocation8] sm:$0x1] %vm210, %v207
    // Predicated region
    $region30: #{net_forward.1} parent=1 // pred_check
      _
    $region31: #{net_forward.1} parent=1 // pred_check_branch
      %213 = sbr.rel (0) target = $region33
    $region32: #{net_forward.1} parent=1 // pred_region
      %s215 = ssub.s32 16, 16
      %216 = vsyncadd [#allocation5], %s215
      %s218 = sshll.u32 [#allocation8], 4
      %s219 = int_to_ptr.vmem [resolvable:$true] %s218
      %221 = dma.vmem_to_hbm [thread:$0]  %s219, 16, %s5, [#allocation5]
    $region33: #{net_forward.1} parent=1 // pred_fallthru
      _
    // Predicated region
    $region34: #{net_forward.1} parent=1 // pred_check
      _
    $region35: #{net_forward.1} parent=1 // pred_check_branch
      %223 = sbr.rel (0) target = $region37
    $region36: #{net_forward.1} parent=1 // pred_region
      %224 = dma.done [#allocation5], 16
    $region37: #{net_forward.1} parent=1 // pred_fallthru
      _
    %225 = vsyncpa [#allocation4], 1
    %226 = vsyncpa [#allocation7], 1
    %227 = vsyncpa [#allocation5], 1

</llo_original>
